<compile_context>
chip_gen: v6e
topology: v6e:2x2x1
jax: 0.10.0
libtpu: 0.0.40
codegen_flags: <defaults>
</compile_context>

<pallas_src>
import jax
import jax.numpy as jnp
from jax.experimental import pallas as pl
from jax.experimental.pallas import tpu as pltpu


def _dwc_kernel(tblw_ref, idx_ref, cnt_ref, out_ref):
    # tblw_ref: (Vp,)   f32, SMEM -- folded per-vocab score, zero-padded to a
    #                               power of two Vp.
    # idx_ref : (D, TN) int, VMEM -- domains in sublanes, batch rows in lanes.
    # cnt_ref : (D, TN) flt, VMEM
    # out_ref : (1, TN) f32, VMEM -- lane-dense output row.
    idx = idx_ref[...].astype(jnp.int32)      # widen once -> 32-bit masks/layout
    cnt = cnt_ref[...].astype(jnp.float32)

    vp = tblw_ref.shape[0]                    # static power of two (small)
    nbits = vp.bit_length() - 1

    # Binary select tree on the low index bits: (Vp-1) selects + nbits bit
    # tests per element (vs ~2*V ops for a naive compare/select chain).
    # Table entries in [V, Vp) are zero, so those indices contribute nothing;
    # indices outside [0, Vp) are invalid (PyTorch's nn.Embedding would raise).
    vals = [tblw_ref[v] for v in range(vp)]   # SMEM scalar reads
    for b in range(nbits):
        bit_set = (idx & (1 << b)) != 0
        vals = [jnp.where(bit_set, vals[2 * k + 1], vals[2 * k])
                for k in range(len(vals) // 2)]
    gathered = vals[0]                        # (D, TN) f32 == tblw[idx]

    # Weight by counts and reduce over the domain (sublane) axis -> (1, TN).
    out_ref[...] = jnp.sum(gathered * cnt, axis=0, keepdims=True)


def domain_weighted_classifier_fwd(domain_indices, counts, embd_table, weights,
                                   score_scale=1.0, block_n=65536,
                                   counts_dtype=jnp.bfloat16):
    """Pallas forward for DomainWeightedClassifier.

    domain_indices: (N, D) int   -- domain ids in [0, V)
    counts        : (N, D) float -- per-domain counts (small integers)
    embd_table    : (V, E) float -- nn.Embedding weight
    weights       : (E,)   float -- fixed per-feature weights (1 << i)
    returns       : (N, 1) float32

    counts_dtype=bfloat16 streams counts at 2 B/elem; this is exact as long as
    counts are integers < 256 (pass jnp.float32 otherwise).
    """
    N, D = domain_indices.shape
    V, E = embd_table.shape

    # --- fold parameters:  tblw[v] = sum_e embd[v, e] * weights[e] * scale ---
    tblw = embd_table.astype(jnp.float32) @ weights.reshape(E).astype(jnp.float32)
    tblw = tblw * jnp.float32(score_scale)                      # (V,)
    vp = max(2, pl.next_power_of_2(V))                          # tree size
    if vp != V:
        tblw = jnp.pad(tblw, (0, vp - V))                       # zeros -> OOB == 0

    # --- tile sizing (lane axis = batch) ---------------------------------
    tn_req = max(128, pl.cdiv(int(block_n), 128) * 128)         # >=128, %128==0
    n128 = pl.cdiv(N, 128) * 128
    tn = min(tn_req, n128)
    if tn == n128 and n128 >= 256:
        # Split a single full-batch tile in two so ("parallel",) grid
        # semantics can use both TensorCores (matters on v7x).
        tn = pl.cdiv(n128 // 2, 128) * 128
    n_pad = pl.cdiv(N, tn) * tn
    grid = (n_pad // tn,)

    # --- narrow + pad + transpose (cast first so the layout pass moves 3 B/elem)
    idx_dtype = jnp.int8 if V <= 127 else jnp.int32
    idx = domain_indices.astype(idx_dtype)
    cnt = counts.astype(counts_dtype)
    if n_pad != N:
        idx = jnp.pad(idx, ((0, n_pad - N), (0, 0)))            # idx 0, cnt 0
        cnt = jnp.pad(cnt, ((0, n_pad - N), (0, 0)))            # -> contributes 0
    idx_t = idx.T                                               # (D, n_pad)
    cnt_t = cnt.T                                               # (D, n_pad)

    # --- VMEM budget: double-buffered streams + output + Mosaic temp headroom
    idx_b = jnp.dtype(idx_dtype).itemsize
    cnt_b = jnp.dtype(counts_dtype).itemsize
    stream_bytes = 2 * D * tn * (idx_b + cnt_b) + 2 * tn * 4
    temp_bytes = 10 * D * tn * 4
    vmem_limit = int(min(max(stream_bytes + temp_bytes + (2 << 20), 32 << 20),
                         48 << 20))                             # fits v7x's 64 MiB

    out_t = pl.pallas_call(
        _dwc_kernel,
        out_shape=jax.ShapeDtypeStruct((1, n_pad), jnp.float32),
        grid=grid,
        in_specs=[
            pl.BlockSpec(memory_space=pltpu.MemorySpace.SMEM),  # tblw (Vp,)
            pl.BlockSpec((D, tn), lambda i: (0, i)),            # idx_t
            pl.BlockSpec((D, tn), lambda i: (0, i)),            # cnt_t
        ],
        out_specs=pl.BlockSpec((1, tn), lambda i: (0, i)),
        compiler_params=pltpu.CompilerParams(
            dimension_semantics=("parallel",),
            vmem_limit_bytes=vmem_limit),
    )(tblw, idx_t, cnt_t)

    # (1, n_pad) lane-dense slab -> (N, 1)
    return out_t.reshape(n_pad, 1)[:N]


def _reference_fwd(domain_indices, counts, embd_table, weights, score_scale=1.0):
    embds = embd_table[domain_indices]                        # (N, D, E)
    scores = jnp.sum(embds * counts[:, :, None], axis=1)      # (N, E)
    out = scores @ weights.reshape(-1, 1)                     # (N, 1)
    return out * score_scale


if __name__ == "__main__":
    key = jax.random.PRNGKey(0)
    keys = jax.random.split(key, 8)

    n_score = 4
    weights = jnp.asarray([float(1 << i) for i in range(n_score)], jnp.float32)

    # Case 1: tiny batch, V a power of two, single grid step.
    V1 = 6 + 2
    embd1 = jax.random.normal(keys[0], (V1, n_score), dtype=jnp.float32)
    N1, D1 = 8, 8
    idx1 = jax.random.randint(keys[1], (N1, D1), 0, V1, dtype=jnp.int32)
    cnt1 = jax.random.randint(keys[2], (N1, D1), 0, 5).astype(jnp.float32)
    out1 = jax.block_until_ready(
        domain_weighted_classifier_fwd(idx1, cnt1, embd1, weights, 1.0))
    ref1 = _reference_fwd(idx1, cnt1, embd1, weights, 1.0)
    assert out1.shape == (N1, 1)
    assert jnp.allclose(out1, ref1, rtol=1e-5, atol=1e-4), (out1, ref1)

    # Case 2: batch not a multiple of the tile -> padding + multi-step grid,
    # non-unit score_scale.
    V2 = 6 + 2
    embd2 = jax.random.normal(keys[3], (V2, n_score), dtype=jnp.float32)
    N2, D2 = 300, 8
    idx2 = jax.random.randint(keys[4], (N2, D2), 0, V2, dtype=jnp.int32)
    cnt2 = jax.random.randint(keys[5], (N2, D2), 0, 5).astype(jnp.float32)
    out2 = jax.block_until_ready(
        domain_weighted_classifier_fwd(idx2, cnt2, embd2, weights, 0.5))
    ref2 = _reference_fwd(idx2, cnt2, embd2, weights, 0.5)
    assert out2.shape == (N2, 1)
    assert jnp.allclose(out2, ref2, rtol=1e-5, atol=1e-4), (out2, ref2)

    # Case 3: V not a power of two -> exercises the zero-padded select tree.
    V3 = 3 + 2
    embd3 = jax.random.normal(keys[6], (V3, n_score), dtype=jnp.float32)
    N3, D3 = 16, 5
    idx3 = jax.random.randint(keys[7], (N3, D3), 0, V3, dtype=jnp.int32)
    cnt3 = jnp.ones((N3, D3), jnp.float32) * 2.0
    out3 = jax.block_until_ready(
        domain_weighted_classifier_fwd(idx3, cnt3, embd3, weights, 1.0))
    ref3 = _reference_fwd(idx3, cnt3, embd3, weights, 1.0)
    assert out3.shape == (N3, 1)
    assert jnp.allclose(out3, ref3, rtol=1e-5, atol=1e-4), (out3, ref3)

    print("KERNEL_OK")
</pallas_src>

<mosaic_0001>
module attributes {stable_mosaic.version = 11 : i64} {
  func.func @_dwc_kernel(%arg0: i32, %arg1: memref<8xf32, #tpu.memory_space<smem>>, %arg2: memref<8x128xi8, #tpu.memory_space<vmem>>, %arg3: memref<8x128xbf16, #tpu.memory_space<vmem>>, %arg4: memref<1x128xf32, #tpu.memory_space<vmem>>) attributes {dimension_semantics = [#tpu.dimension_semantics<parallel>], iteration_bounds = array<i64: 1>, scalar_prefetch = 0 : i64, scratch_operands = 0 : i64, tpu.core_type = #tpu.core_type<tc>, window_params = [{transform_indices = @transform_0, window_bounds = array<i64: 8>}, {transform_indices = @transform_1, window_bounds = array<i64: 8, 128>}, {transform_indices = @transform_2, window_bounds = array<i64: 8, 128>}, {transform_indices = @transform_3, window_bounds = array<i64: 1, 128>}]} {
    %c0 = arith.constant 0 : index
    %c0_0 = arith.constant 0 : index
    %0 = vector.load %arg2[%c0, %c0_0] : memref<8x128xi8, #tpu.memory_space<vmem>>, vector<8x128xi8>
    %1 = arith.extsi %0 : vector<8x128xi8> to vector<8x128xi32>
    %c0_1 = arith.constant 0 : index
    %c0_2 = arith.constant 0 : index
    %2 = vector.load %arg3[%c0_1, %c0_2] : memref<8x128xbf16, #tpu.memory_space<vmem>>, vector<8x128xbf16>
    %3 = arith.extf %2 : vector<8x128xbf16> to vector<8x128xf32>
    %c0_3 = arith.constant 0 : index
    %4 = memref.load %arg1[%c0_3] : memref<8xf32, #tpu.memory_space<smem>>
    %c1 = arith.constant 1 : index
    %5 = memref.load %arg1[%c1] : memref<8xf32, #tpu.memory_space<smem>>
    %c2 = arith.constant 2 : index
    %6 = memref.load %arg1[%c2] : memref<8xf32, #tpu.memory_space<smem>>
    %c3 = arith.constant 3 : index
    %7 = memref.load %arg1[%c3] : memref<8xf32, #tpu.memory_space<smem>>
    %c4 = arith.constant 4 : index
    %8 = memref.load %arg1[%c4] : memref<8xf32, #tpu.memory_space<smem>>
    %c5 = arith.constant 5 : index
    %9 = memref.load %arg1[%c5] : memref<8xf32, #tpu.memory_space<smem>>
    %c6 = arith.constant 6 : index
    %10 = memref.load %arg1[%c6] : memref<8xf32, #tpu.memory_space<smem>>
    %c7 = arith.constant 7 : index
    %11 = memref.load %arg1[%c7] : memref<8xf32, #tpu.memory_space<smem>>
    %c1_i32 = arith.constant 1 : i32
    %12 = vector.broadcast %c1_i32 : i32 to vector<8x128xi32>
    %13 = arith.andi %1, %12 : vector<8x128xi32>
    %c0_i32 = arith.constant 0 : i32
    %14 = vector.broadcast %c0_i32 : i32 to vector<8x128xi32>
    %15 = arith.cmpi ne, %13, %14 : vector<8x128xi32>
    %16 = vector.broadcast %5 : f32 to vector<8x128xf32>
    %17 = vector.broadcast %4 : f32 to vector<8x128xf32>
    %18 = arith.select %15, %16, %17 : vector<8x128xi1>, vector<8x128xf32>
    %19 = vector.broadcast %7 : f32 to vector<8x128xf32>
    %20 = vector.broadcast %6 : f32 to vector<8x128xf32>
    %21 = arith.select %15, %19, %20 : vector<8x128xi1>, vector<8x128xf32>
    %22 = vector.broadcast %9 : f32 to vector<8x128xf32>
    %23 = vector.broadcast %8 : f32 to vector<8x128xf32>
    %24 = arith.select %15, %22, %23 : vector<8x128xi1>, vector<8x128xf32>
    %25 = vector.broadcast %11 : f32 to vector<8x128xf32>
    %26 = vector.broadcast %10 : f32 to vector<8x128xf32>
    %27 = arith.select %15, %25, %26 : vector<8x128xi1>, vector<8x128xf32>
    %c2_i32 = arith.constant 2 : i32
    %28 = vector.broadcast %c2_i32 : i32 to vector<8x128xi32>
    %29 = arith.andi %1, %28 : vector<8x128xi32>
    %c0_i32_4 = arith.constant 0 : i32
    %30 = vector.broadcast %c0_i32_4 : i32 to vector<8x128xi32>
    %31 = arith.cmpi ne, %29, %30 : vector<8x128xi32>
    %32 = arith.select %31, %21, %18 : vector<8x128xi1>, vector<8x128xf32>
    %33 = arith.select %31, %27, %24 : vector<8x128xi1>, vector<8x128xf32>
    %c4_i32 = arith.constant 4 : i32
    %34 = vector.broadcast %c4_i32 : i32 to vector<8x128xi32>
    %35 = arith.andi %1, %34 : vector<8x128xi32>
    %c0_i32_5 = arith.constant 0 : i32
    %36 = vector.broadcast %c0_i32_5 : i32 to vector<8x128xi32>
    %37 = arith.cmpi ne, %35, %36 : vector<8x128xi32>
    %38 = arith.select %37, %33, %32 : vector<8x128xi1>, vector<8x128xf32>
    %39 = arith.mulf %38, %3 : vector<8x128xf32>
    %cst = arith.constant dense<0.000000e+00> : vector<128xf32>
    %40 = vector.multi_reduction <add>, %39, %cst [0] : vector<8x128xf32> to vector<128xf32>
    %41 = vector.shape_cast %40 : vector<128xf32> to vector<1x128xf32>
    %c0_6 = arith.constant 0 : index
    %c0_7 = arith.constant 0 : index
    %42 = vector.load %arg4[%c0_6, %c0_7] : memref<1x128xf32, #tpu.memory_space<vmem>>, vector<1x128xf32>
    tpu.vector_store %arg4[%c0_6, %c0_7], %41 {strides = array<i32>} : memref<1x128xf32, #tpu.memory_space<vmem>>, vector<1x128xf32>,
    return
  }
  func.func @transform_0(%arg0: i32) -> i32 {
    %c0_i32 = arith.constant 0 : i32
    %c0_i32_0 = arith.constant 0 : i32
    return %c0_i32 : i32
  }
  func.func @transform_1(%arg0: i32) -> (i32, i32) {
    %c0_i32 = arith.constant 0 : i32
    %c0_i32_0 = arith.constant 0 : i32
    return %c0_i32, %arg0 : i32, i32
  }
  func.func @transform_2(%arg0: i32) -> (i32, i32) {
    %c0_i32 = arith.constant 0 : i32
    %c0_i32_0 = arith.constant 0 : i32
    return %c0_i32, %arg0 : i32, i32
  }
  func.func @transform_3(%arg0: i32) -> (i32, i32) {
    %c0_i32 = arith.constant 0 : i32
    %c0_i32_0 = arith.constant 0 : i32
    return %c0_i32, %arg0 : i32, i32
  }
}

</mosaic_0001>

<llo_original>
// kernel: tpu_custom_call.1
$region0: #{tpu_custom_call.1}
  #allocation0 [shape = 'u32[]', space=smem, size = 0x4, offset = 0x4, fixed_abs, tag = 'smem constant byte address 0x4 - core index']
  #allocation1 [shape = 'u32[144,128]{1,0:T(1,128)}', space=vmem, size = 0x12000, scoped, tag = 'internal scratch']
  %s0 = inlined_call_operand.hbm [shape: f32[8], index: 0, kind: input, shape index: {}]
  %s1 = inlined_call_operand.hbm [shape: s8[8,128], index: 1, kind: input, shape index: {}]
  %s2 = inlined_call_operand.hbm [shape: bf16[8,128], index: 2, kind: input, shape index: {}]
  %s3 = inlined_call_operand.hbm [shape: f32[1,128], index: 3, kind: output, shape index: {}]
  %s4 = sld [smem:[#allocation0]]
  $region34: #{tpu_custom_call.1} parent=0
    _
  %s6 = ssub.s32 1, %s4
  %s7 = scalar_select 0, %s6, %s4
  $region1: #{tpu_custom_call.1} parent=0
    #allocation2 [shape = 'u8[512]{0}', space=smem, size = 0x200, scoped, tag = 'input window, operand 0, single buffered']
    #allocation3 [shape = 's32[1]{0}', space=sflag, size = 0x4, scoped, tag = 'scoped memory for tpu_custom_call.1']
    #allocation4 [shape = 's32[1]{0}', space=sflag, size = 0x4, scoped, tag = 'scoped memory for tpu_custom_call.1']
    #allocation5 [shape = 's32[1]{0}', space=sflag, size = 0x4, scoped, tag = 'scoped memory for tpu_custom_call.1']
    #allocation6 [shape = 'u8[1024]{0}', space=vmem, size = 0x400, scoped, tag = 'input window, operand 1, single buffered']
    #allocation7 [shape = 'u8[2048]{0}', space=vmem, size = 0x800, scoped, tag = 'input window, operand 2, single buffered']
    #allocation8 [shape = 's32[1]{0}', space=sflag, size = 0x4, scoped, tag = 'scoped memory for tpu_custom_call.1']
    #allocation9 [shape = 'u8[512]{0}', space=vmem, size = 0x400, scoped, tag = 'output window, operand 0, single buffered']
    %8 = vsyncpa [#allocation5], 0
    %9 = vsyncpa [#allocation3], 0
    %10 = vsyncpa [#allocation8], 0
    %11 = vsyncpa [#allocation4], 0
    // Predicated region
    $region2: #{tpu_custom_call.1} parent=1 // pred_check
      _
    $region3: #{tpu_custom_call.1} parent=1 // pred_check_branch
      %13 = sbr.rel (0) target = $region5
    $region4: #{tpu_custom_call.1} parent=1 // pred_region
      %s15 = ssub.s32 16, 16
      %16 = vsyncadd [#allocation5], %s15
      %19 = dma.hbm_to_smem %s0, 16, [#allocation2], [#allocation5]
    $region5: #{tpu_custom_call.1} parent=1 // pred_fallthru
      _
    // Predicated region
    $region6: #{tpu_custom_call.1} parent=1 // pred_check
      _
    $region7: #{tpu_custom_call.1} parent=1 // pred_check_branch
      %21 = sbr.rel (0) target = $region9
    $region8: #{tpu_custom_call.1} parent=1 // pred_region
      %s23 = ssub.s32 32, 32
      %24 = vsyncadd [#allocation3], %s23
      %s26 = sshll.u32 [#allocation6], 4
      %s27 = int_to_ptr.vmem [resolvable:$true] %s26
      %29 = dma.hbm_to_vmem [thread:$0]  %s1, 32, %s27, [#allocation3]
    $region9: #{tpu_custom_call.1} parent=1 // pred_fallthru
      _
    // Predicated region
    $region10: #{tpu_custom_call.1} parent=1 // pred_check
      _
    $region11: #{tpu_custom_call.1} parent=1 // pred_check_branch
      %31 = sbr.rel (0) target = $region13
    $region12: #{tpu_custom_call.1} parent=1 // pred_region
      %s33 = ssub.s32 64, 64
      %34 = vsyncadd [#allocation8], %s33
      %s36 = sshll.u32 [#allocation7], 4
      %s37 = int_to_ptr.vmem [resolvable:$true] %s36
      %39 = dma.hbm_to_vmem [thread:$0]  %s2, 64, %s37, [#allocation8]
    $region13: #{tpu_custom_call.1} parent=1 // pred_fallthru
      _
    // Predicated region
    $region14: #{tpu_custom_call.1} parent=1 // pred_check
      _
    $region15: #{tpu_custom_call.1} parent=1 // pred_check_branch
      %41 = sbr.rel (0) target = $region17
    $region16: #{tpu_custom_call.1} parent=1 // pred_region
      %42 = dma.done [#allocation5], 16
    $region17: #{tpu_custom_call.1} parent=1 // pred_fallthru
      _
    // Predicated region
    $region18: #{tpu_custom_call.1} parent=1 // pred_check
      _
    $region19: #{tpu_custom_call.1} parent=1 // pred_check_branch
      %44 = sbr.rel (0) target = $region21
    $region20: #{tpu_custom_call.1} parent=1 // pred_region
      %45 = dma.done [#allocation3], 32
    $region21: #{tpu_custom_call.1} parent=1 // pred_fallthru
      _
    // Predicated region
    $region22: #{tpu_custom_call.1} parent=1 // pred_check
      _
    $region23: #{tpu_custom_call.1} parent=1 // pred_check_branch
      %47 = sbr.rel (0) target = $region25
    $region24: #{tpu_custom_call.1} parent=1 // pred_region
      %48 = dma.done [#allocation8], 64
    $region25: #{tpu_custom_call.1} parent=1 // pred_fallthru
      _
    %49 = sfence
    %v50 = vld [vmem:[#allocation6] sm:$0x3]
    %v51 = vunpack.c.0.s8 %v50
    %v52 = vld [vmem:[#allocation7] sm:$0xf]
    %v53 = vunpack.c.l.bf16 %v52
    %s54 = sld [smem:[#allocation2]]
    %s55 = sld [smem:[#allocation2 + $0x1]]
    %s56 = sld [smem:[#allocation2 + $0x2]]
    %s57 = sld [smem:[#allocation2 + $0x3]]
    %s58 = sld [smem:[#allocation2 + $0x4]]
    %s59 = sld [smem:[#allocation2 + $0x5]]
    %s60 = sld [smem:[#allocation2 + $0x6]]
    %s61 = sld [smem:[#allocation2 + $0x7]]
    %v62 = vand.u32 %v51, 1
    %vm63 = vcmp.ne.s32.totalorder %v62, 0
    %v64 = vstv %s55
    %v65 = vstv %s54
    %v66 = vsel %vm63, %v64, %v65
    %v67 = vstv %s57
    %v68 = vstv %s56
    %v69 = vsel %vm63, %v67, %v68
    %v70 = vstv %s59
    %v71 = vstv %s58
    %v72 = vsel %vm63, %v70, %v71
    %v73 = vstv %s61
    %v74 = vstv %s60
    %v75 = vsel %vm63, %v73, %v74
    %v76 = vand.u32 %v51, 2
    %vm77 = vcmp.ne.s32.totalorder %v76, 0
    %v78 = vsel %vm77, %v69, %v66
    %v79 = vsel %vm77, %v75, %v72
    %v80 = vand.u32 %v51, 4
    %vm81 = vcmp.ne.s32.totalorder %v80, 0
    %v82 = vsel %vm81, %v79, %v78
    %v83 = vmul.f32 %v82, %v53
    %v84 = vrot.slane %v83, 4
    %v85 = vadd.f32 %v83, %v84
    %v86 = vrot.slane %v85, 2
    %v87 = vadd.f32 %v85, %v86
    %v88 = vrot.slane %v87, 1
    %v89 = vadd.f32 %v87, %v88
    %90 = vst [vmem:[#allocation9] sm:$0x1] %v89
    // Predicated region
    $region26: #{tpu_custom_call.1} parent=1 // pred_check
      _
    $region27: #{tpu_custom_call.1} parent=1 // pred_check_branch
      %92 = sbr.rel (0) target = $region29
    $region28: #{tpu_custom_call.1} parent=1 // pred_region
      %s94 = ssub.s32 16, 16
      %95 = vsyncadd [#allocation4], %s94
      %s97 = sshll.u32 [#allocation9], 4
      %s98 = int_to_ptr.vmem [resolvable:$true] %s97
      %100 = dma.vmem_to_hbm [thread:$0]  %s98, 16, %s3, [#allocation4]
    $region29: #{tpu_custom_call.1} parent=1 // pred_fallthru
      _
    // Predicated region
    $region30: #{tpu_custom_call.1} parent=1 // pred_check
      _
    $region31: #{tpu_custom_call.1} parent=1 // pred_check_branch
      %102 = sbr.rel (0) target = $region33
    $region32: #{tpu_custom_call.1} parent=1 // pred_region
      %103 = dma.done [#allocation4], 16
    $region33: #{tpu_custom_call.1} parent=1 // pred_fallthru
      _
    %104 = vsyncpa [#allocation3], 1
    %105 = vsyncpa [#allocation8], 1
    %106 = vsyncpa [#allocation4], 1
    %107 = vsyncpa [#allocation5], 1

</llo_original>
